<compile_context>
chip_gen: v6e
topology: v6e:2x2x1
jax: 0.10.0
libtpu: 0.0.40
codegen_flags: <defaults>
</compile_context>

<pallas_src>
from typing import NamedTuple

import jax
import jax.numpy as jnp
from jax.experimental import pallas as pl
from jax.experimental.pallas import tpu as pltpu


def _round_up(x: int, m: int) -> int:
    return ((x + m - 1) // m) * m


def _vmem_capacity_bytes() -> int:
    try:
        return int(pltpu.get_tpu_info().vmem_capacity_bytes)
    except Exception:
        return 64 * 1024 * 1024  # conservative fallback (v7x per-core VMEM)


def _vmem_footprint(tm: int, tn: int, np_: int,
                    x_bytes: int, w_bytes: int, out_bytes: int) -> int:
    """Double-buffered per-step VMEM footprint of the kernel's operands."""
    xb = tm * np_ * x_bytes      # full-K f32 x row panel
    wb = np_ * tn * w_bytes      # bf16 weight column panel
    bb = tn * 4                  # bias slice
    ob = tm * tn * out_bytes     # output tile
    return 2 * (xb + wb + bb + ob)


class ResidualLinearParams(NamedTuple):
    w_panels: jax.Array   # (np_//tn, np_, tn) bf16, panel-major (contiguous DMA)
    b_row: jax.Array      # (1, np_) f32
    hidden: int
    np_: int
    tn: int


def prepack_residual_linear(w_t, b, *, tn: int = 256,
                            compute_dtype=jnp.bfloat16) -> ResidualLinearParams:
    """One-time (init-time) packing of the Linear parameters.

    w_t : (hidden, hidden)  already transposed so that x @ w_t == x @ W.T
    b   : (hidden,)
    """
    hidden_in, hidden_out = w_t.shape
    assert hidden_in == hidden_out, "residual requires a square Linear"
    hidden = hidden_in
    tn = min(tn, _round_up(hidden, 128))
    np_ = _round_up(hidden, tn)

    wp = jnp.pad(w_t, ((0, np_ - hidden), (0, np_ - hidden))).astype(compute_dtype)
    # Panel-major layout: panel j holds output columns [j*tn, (j+1)*tn) as one
    # contiguous (np_, tn) slab -> single contiguous HBM region per grid step.
    w_panels = wp.reshape(np_, np_ // tn, tn).transpose(1, 0, 2)

    b_row = jnp.pad(b, (0, np_ - hidden)).astype(jnp.float32).reshape(1, np_)
    return ResidualLinearParams(w_panels, b_row, hidden, np_, tn)


def _residual_linear_kernel(x_ref, w_ref, b_ref, o_ref):
    # x_ref : (tm, np_) f32  -- full-K row panel of x (resident across j)
    # w_ref : (np_, tn) bf16 -- pre-packed contiguous weight column panel
    # b_ref : (1,  tn)  f32  -- bias slice
    # o_ref : (tm, tn)       -- output tile
    tn = o_ref.shape[-1]
    j = pl.program_id(1)

    # MXU matmul in bf16 with f32 accumulate; the cast happens in-kernel so x
    # is streamed from HBM exactly once (in f32, keeping the skip connection
    # exact).
    y = jnp.dot(x_ref[...].astype(w_ref.dtype), w_ref[...],
                preferred_element_type=jnp.float32)

    # The Linear is square (K == N), so the residual tile is just columns
    # [j*tn, (j+1)*tn) of the resident full-K x panel (128-aligned start).
    start = pl.multiple_of(j * tn, tn)
    res = x_ref[:, pl.ds(start, tn)].astype(jnp.float32)

    o_ref[...] = (y + b_ref[...] + res).astype(o_ref.dtype)


def residual_linear(x, params: ResidualLinearParams, *, tm: int = 512):
    """out = x @ w_t + b + x, fused in a tiled Pallas TPU kernel.

    x : (tokens, hidden) -- activations (residual path stays in x.dtype/f32)
    """
    tokens, hidden = x.shape
    assert hidden == params.hidden
    np_, tn = params.np_, params.tn
    out_dtype = x.dtype

    x_bytes = jnp.dtype(x.dtype).itemsize
    w_bytes = jnp.dtype(params.w_panels.dtype).itemsize
    out_bytes = jnp.dtype(out_dtype).itemsize

    # Big M tile (fewer re-streams of W), shrunk until the double-buffered
    # working set fits comfortably in this chip generation's VMEM.
    tm = _round_up(min(tm, _round_up(tokens, 8)), 8)
    phys = _vmem_capacity_bytes()
    budget = int(phys * 0.7)
    while tm > 8 and _vmem_footprint(tm, tn, np_, x_bytes, w_bytes, out_bytes) > budget:
        tm = max(8, _round_up(tm // 2, 8))
    mp_ = _round_up(tokens, tm)

    # Only pad when the shape is not already tile-aligned (avoids an extra
    # HBM pass over x per call at production shapes).
    if (mp_, np_) != (tokens, hidden):
        xp = jnp.pad(x, ((0, mp_ - tokens), (0, np_ - hidden)))
    else:
        xp = x

    footprint = _vmem_footprint(tm, tn, np_, x_bytes, w_bytes, out_bytes)
    vmem_limit = min(int(phys * 0.9), max(32 << 20, footprint + footprint // 2))

    grid = (mp_ // tm, np_ // tn)  # j (N) is the fastest axis -> x panel resident

    out = pl.pallas_call(
        _residual_linear_kernel,
        out_shape=jax.ShapeDtypeStruct((mp_, np_), out_dtype),
        grid_spec=pl.GridSpec(
            grid=grid,
            in_specs=[
                pl.BlockSpec((tm, np_), lambda i, j: (i, 0)),          # x row panel
                pl.BlockSpec((None, np_, tn), lambda i, j: (j, 0, 0)),  # W panel
                pl.BlockSpec((1, tn), lambda i, j: (0, j)),             # bias slice
            ],
            out_specs=pl.BlockSpec((tm, tn), lambda i, j: (i, j)),
        ),
        compiler_params=pltpu.CompilerParams(
            dimension_semantics=("parallel", "parallel"),
            vmem_limit_bytes=int(vmem_limit),
        ),
    )(xp, params.w_panels, params.b_row)

    if (mp_, np_) != (tokens, hidden):
        out = out[:tokens, :hidden]
    return out


def residual_apply(x, params: ResidualLinearParams, *, tm: int = 512):
    """Handles leading batch dims like PyTorch Linear (glue: reshape only)."""
    lead = x.shape[:-1]
    hidden = x.shape[-1]
    out = residual_linear(x.reshape(-1, hidden), params, tm=tm)
    return out.reshape(*lead, hidden)


if __name__ == "__main__":
    key = jax.random.PRNGKey(0)
    k_x, k_w, k_b = jax.random.split(key, 3)

    batch, seq, hidden = 2, 8, 32
    x = jax.random.normal(k_x, (batch, seq, hidden), dtype=jnp.float32)

    # Deterministic parameters for fn = Linear(hidden, hidden)
    # (PyTorch stores W as (out, in); we keep it pre-transposed as (in, out)).
    w = jax.random.normal(k_w, (hidden, hidden), dtype=jnp.float32) * 0.02
    b = jax.random.normal(k_b, (hidden,), dtype=jnp.float32) * 0.02

    params = prepack_residual_linear(w.T, b)
    out = residual_apply(x, params)
    jax.block_until_ready(out)
    assert out.shape == x.shape

    # Reference 1: matches the kernel's bf16-operand / f32-accumulate matmul
    # with an exact-f32 residual path.
    x2d = x.reshape(-1, hidden)
    ref_bf16 = (
        jnp.dot(x2d.astype(jnp.bfloat16), w.T.astype(jnp.bfloat16),
                preferred_element_type=jnp.float32)
        + b + x2d
    ).reshape(batch, seq, hidden)
    assert jnp.allclose(out, ref_bf16, atol=1e-4, rtol=1e-4)

    # Reference 2: pure f32 semantics of residual(Linear) — loose tolerance
    # covers the intentional bf16 matmul operands.
    ref_f32 = jnp.einsum("bsh,ho->bso", x, w.T) + b + x
    assert jnp.allclose(out, ref_f32, atol=2e-2, rtol=2e-2)

    # Second check: multi-tile grid (several i and j steps), j > 0 residual
    # slicing, and row/column padding — still tiny shapes.
    t2, h2 = 48, 384
    k_x2, k_w2, k_b2 = jax.random.split(jax.random.PRNGKey(1), 3)
    x2 = jax.random.normal(k_x2, (t2, h2), dtype=jnp.float32)
    w2 = jax.random.normal(k_w2, (h2, h2), dtype=jnp.float32) * 0.02
    b2 = jax.random.normal(k_b2, (h2,), dtype=jnp.float32) * 0.02
    params2 = prepack_residual_linear(w2.T, b2, tn=256)
    out2 = residual_linear(x2, params2, tm=16)
    jax.block_until_ready(out2)
    ref2 = (jnp.dot(x2.astype(jnp.bfloat16), w2.T.astype(jnp.bfloat16),
                    preferred_element_type=jnp.float32) + b2 + x2)
    assert jnp.allclose(out2, ref2, atol=3e-3, rtol=3e-3)

    print("KERNEL_OK")
</pallas_src>

<mosaic_0001>
module attributes {stable_mosaic.version = 11 : i64} {
  func.func @_residual_linear_kernel(%arg0: i32, %arg1: i32, %arg2: memref<16x128xf32, #tpu.memory_space<vmem>>, %arg3: memref<1x128x128xbf16, #tpu.memory_space<vmem>>, %arg4: memref<1x128xf32, #tpu.memory_space<vmem>>, %arg5: memref<16x128xf32, #tpu.memory_space<vmem>>) attributes {dimension_semantics = [#tpu.dimension_semantics<parallel>, #tpu.dimension_semantics<parallel>], iteration_bounds = array<i64: 1, 1>, scalar_prefetch = 0 : i64, scratch_operands = 0 : i64, tpu.core_type = #tpu.core_type<tc>, window_params = [{transform_indices = @transform_0, window_bounds = array<i64: 16, 128>}, {transform_indices = @transform_1, window_bounds = array<i64: 1, 128, 128>}, {transform_indices = @transform_2, window_bounds = array<i64: 1, 128>}, {transform_indices = @transform_3, window_bounds = array<i64: 16, 128>}]} {
    %c0 = arith.constant 0 : index
    %c0_0 = arith.constant 0 : index
    %0 = vector.load %arg2[%c0, %c0_0] : memref<16x128xf32, #tpu.memory_space<vmem>>, vector<16x128xf32>
    %1 = arith.truncf %0 : vector<16x128xf32> to vector<16x128xbf16>
    %c0_1 = arith.constant 0 : index
    %c0_2 = arith.constant 0 : index
    %c0_3 = arith.constant 0 : index
    %2 = vector.load %arg3[%c0_1, %c0_2, %c0_3] : memref<1x128x128xbf16, #tpu.memory_space<vmem>>, vector<1x128x128xbf16>
    %3 = vector.shape_cast %2 : vector<1x128x128xbf16> to vector<128x128xbf16>
    %cst = arith.constant dense<0.000000e+00> : vector<16x128xf32>
    %4 = tpu.matmul %1, %3, %cst {dimension_numbers = #tpu.dot_dimension_numbers<[1], [0], [0], [1], [0, 0, 1, 1], [], []>} : vector<16x128xbf16>, vector<128x128xbf16>, vector<16x128xf32> -> vector<16x128xf32>
    %c128_i32 = arith.constant 128 : i32
    %5 = arith.muli %arg1, %c128_i32 : i32
    %6 = tpu.assume_multiple %5, 128 : i32
    %c0_4 = arith.constant 0 : index
    %7 = arith.index_cast %6 : i32 to index
    %8 = vector.load %arg2[%c0_4, %7] : memref<16x128xf32, #tpu.memory_space<vmem>>, vector<16x128xf32>
    %c0_5 = arith.constant 0 : index
    %c0_6 = arith.constant 0 : index
    %9 = vector.load %arg4[%c0_5, %c0_6] : memref<1x128xf32, #tpu.memory_space<vmem>>, vector<1x128xf32>
    %10 = vector.broadcast %9 : vector<1x128xf32> to vector<16x128xf32>
    %11 = arith.addf %4, %10 : vector<16x128xf32>
    %12 = arith.addf %11, %8 : vector<16x128xf32>
    %c0_7 = arith.constant 0 : index
    %c0_8 = arith.constant 0 : index
    %13 = vector.load %arg5[%c0_7, %c0_8] : memref<16x128xf32, #tpu.memory_space<vmem>>, vector<16x128xf32>
    tpu.vector_store %arg5[%c0_7, %c0_8], %12 {strides = array<i32>} : memref<16x128xf32, #tpu.memory_space<vmem>>, vector<16x128xf32>,
    return
  }
  func.func @transform_0(%arg0: i32, %arg1: i32) -> (i32, i32) {
    %c0_i32 = arith.constant 0 : i32
    %c0_i32_0 = arith.constant 0 : i32
    return %arg0, %c0_i32 : i32, i32
  }
  func.func @transform_1(%arg0: i32, %arg1: i32) -> (i32, i32, i32) {
    %c0_i32 = arith.constant 0 : i32
    %c0_i32_0 = arith.constant 0 : i32
    %c0_i32_1 = arith.constant 0 : i32
    return %arg1, %c0_i32, %c0_i32_0 : i32, i32, i32
  }
  func.func @transform_2(%arg0: i32, %arg1: i32) -> (i32, i32) {
    %c0_i32 = arith.constant 0 : i32
    %c0_i32_0 = arith.constant 0 : i32
    return %c0_i32, %arg1 : i32, i32
  }
  func.func @transform_3(%arg0: i32, %arg1: i32) -> (i32, i32) {
    %c0_i32 = arith.constant 0 : i32
    return %arg0, %arg1 : i32, i32
  }
}

</mosaic_0001>

<llo_original>
// kernel: tpu_custom_call.1
$region0: #{tpu_custom_call.1}
  #allocation0 [shape = 'u32[]', space=smem, size = 0x4, offset = 0x4, fixed_abs, tag = 'smem constant byte address 0x4 - core index']
  #allocation1 [shape = 'u32[144,128]{1,0:T(1,128)}', space=vmem, size = 0x12000, scoped, tag = 'internal scratch']
  %s0 = inlined_call_operand.hbm [shape: f32[16,128], index: 0, kind: input, shape index: {}]
  %s1 = inlined_call_operand.hbm [shape: bf16[1,128,128], index: 1, kind: input, shape index: {}]
  %s2 = inlined_call_operand.vmem [shape: f32[1,128], index: 2, kind: input, shape index: {}]
  %s3 = inlined_call_operand.hbm [shape: f32[16,128], index: 3, kind: output, shape index: {}]
  %s4 = sld [smem:[#allocation0]]
  $region30: #{tpu_custom_call.1} parent=0
    _
  %s6 = ssub.s32 1, %s4
  %s7 = scalar_select 0, %s6, %s4
  $region1: #{tpu_custom_call.1} parent=0
    #allocation2 [shape = 'u8[8192]{0}', space=vmem, size = 0x2000, scoped, tag = 'input window, operand 0, single buffered']
    #allocation3 [shape = 's32[1]{0}', space=sflag, size = 0x4, scoped, tag = 'scoped memory for tpu_custom_call.1']
    #allocation4 [shape = 's32[1]{0}', space=sflag, size = 0x4, scoped, tag = 'scoped memory for tpu_custom_call.1']
    #allocation5 [shape = 'u8[32768]{0}', space=vmem, size = 0x8000, scoped, tag = 'input window, operand 1, single buffered']
    #allocation6 [shape = 's32[1]{0}', space=sflag, size = 0x4, scoped, tag = 'scoped memory for tpu_custom_call.1']
    #allocation7 [shape = 'u8[8192]{0}', space=vmem, size = 0x2000, scoped, tag = 'output window, operand 0, single buffered']
    %8 = vsyncpa [#allocation3], 0
    %9 = vsyncpa [#allocation6], 0
    %10 = vsyncpa [#allocation4], 0
    // Predicated region
    $region2: #{tpu_custom_call.1} parent=1 // pred_check
      _
    $region3: #{tpu_custom_call.1} parent=1 // pred_check_branch
      %12 = sbr.rel (0) target = $region5
    $region4: #{tpu_custom_call.1} parent=1 // pred_region
      %s14 = ssub.s32 256, 256
      %15 = vsyncadd [#allocation3], %s14
      %s16 = sshll.u32 [#allocation2], 4
      %s17 = int_to_ptr.vmem [resolvable:$true] %s16
      %22 = dma.hbm_to_vmem [thread:$0]  %s0, 256, %s17, [#allocation3], 128, 128, 8
    $region5: #{tpu_custom_call.1} parent=1 // pred_fallthru
      _
    // Predicated region
    $region6: #{tpu_custom_call.1} parent=1 // pred_check
      _
    $region7: #{tpu_custom_call.1} parent=1 // pred_check_branch
      %24 = sbr.rel (0) target = $region9
    $region8: #{tpu_custom_call.1} parent=1 // pred_region
      %s26 = ssub.s32 1024, 1024
      %27 = vsyncadd [#allocation6], %s26
      %s28 = sshll.u32 [#allocation5], 4
      %s29 = int_to_ptr.vmem [resolvable:$true] %s28
      %34 = dma.hbm_to_vmem [thread:$0]  %s1, 1024, %s29, [#allocation6], 64, 64, 4
    $region9: #{tpu_custom_call.1} parent=1 // pred_fallthru
      _
    // Predicated region
    $region10: #{tpu_custom_call.1} parent=1 // pred_check
      _
    $region11: #{tpu_custom_call.1} parent=1 // pred_check_branch
      %36 = sbr.rel (0) target = $region13
    $region12: #{tpu_custom_call.1} parent=1 // pred_region
      _
    $region13: #{tpu_custom_call.1} parent=1 // pred_fallthru
      _
    // Predicated region
    $region14: #{tpu_custom_call.1} parent=1 // pred_check
      _
    $region15: #{tpu_custom_call.1} parent=1 // pred_check_branch
      %38 = sbr.rel (0) target = $region17
    $region16: #{tpu_custom_call.1} parent=1 // pred_region
      %39 = dma.done [#allocation3], 256
    $region17: #{tpu_custom_call.1} parent=1 // pred_fallthru
      _
    // Predicated region
    $region18: #{tpu_custom_call.1} parent=1 // pred_check
      _
    $region19: #{tpu_custom_call.1} parent=1 // pred_check_branch
      %41 = sbr.rel (0) target = $region21
    $region20: #{tpu_custom_call.1} parent=1 // pred_region
      %42 = dma.done [#allocation6], 1024
    $region21: #{tpu_custom_call.1} parent=1 // pred_fallthru
      _
    %v44 = vld [vmem:[#allocation2] sm:$0xff]
    %v45 = vld [vmem:[#allocation2 + $0x8] sm:$0xff]
    %v46 = vpack.c.bf16 %v45, %v44
    %v47 = vld [vmem:[#allocation5] sm:$0xf]
    %v48 = vld [vmem:[#allocation5 + $0x4] sm:$0xf]
    %v49 = vld [vmem:[#allocation5 + $0x8] sm:$0xf]
    %v50 = vld [vmem:[#allocation5 + $0xc] sm:$0xf]
    %v51 = vld [vmem:[#allocation5 + $0x10] sm:$0xf]
    %v52 = vld [vmem:[#allocation5 + $0x14] sm:$0xf]
    %v53 = vld [vmem:[#allocation5 + $0x18] sm:$0xf]
    %v54 = vld [vmem:[#allocation5 + $0x1c] sm:$0xf]
    %v55 = vld [vmem:[#allocation5 + $0x20] sm:$0xf]
    %v56 = vld [vmem:[#allocation5 + $0x24] sm:$0xf]
    %v57 = vld [vmem:[#allocation5 + $0x28] sm:$0xf]
    %v58 = vld [vmem:[#allocation5 + $0x2c] sm:$0xf]
    %v59 = vld [vmem:[#allocation5 + $0x30] sm:$0xf]
    %v60 = vld [vmem:[#allocation5 + $0x34] sm:$0xf]
    %v61 = vld [vmem:[#allocation5 + $0x38] sm:$0xf]
    %v62 = vld [vmem:[#allocation5 + $0x3c] sm:$0xf]
    %s63 = smul.u32 0, 128
    %s64 = sshra.s32 %s63, 7
    %s65 = sand.u32 %s63, 127
    %s66 = scalar_lea.vmem [#allocation2], %s64
    %v67 = vld [vmem:[%s66] sm:$0xff]
    %v68 = vld [vmem:[%s66 + $0x8] sm:$0xff]
    %v69 = vld [vmem:[%s2] sm:$0x1]
    %v71 = vlaneseq
    %v72 = vshrl.u32 %v71, 7
    %v73 = vsub.s32 0, %v72
    %v74 = vrot.slane %v69, %v73
    %v92 = vunpack.c.l.b16 %v47
    %v93 = vunpack.c.l.b16 %v48
    %v94 = vunpack.c.l.b16 %v49
    %v95 = vunpack.c.l.b16 %v50
    %v96 = vunpack.c.l.b16 %v51
    %v97 = vunpack.c.l.b16 %v52
    %v98 = vunpack.c.l.b16 %v53
    %v99 = vunpack.c.l.b16 %v54
    %v100 = vunpack.c.l.b16 %v55
    %v101 = vunpack.c.l.b16 %v56
    %v102 = vunpack.c.l.b16 %v57
    %v103 = vunpack.c.l.b16 %v58
    %v104 = vunpack.c.l.b16 %v59
    %v105 = vunpack.c.l.b16 %v60
    %v106 = vunpack.c.l.b16 %v61
    %v107 = vunpack.c.l.b16 %v62
    %v108 = vpack.c.b16 %v93, %v92
    %v109 = vpack.c.b16 %v95, %v94
    %v110 = vpack.c.b16 %v97, %v96
    %v111 = vpack.c.b16 %v99, %v98
    %v112 = vpack.c.b16 %v101, %v100
    %v113 = vpack.c.b16 %v103, %v102
    %v114 = vpack.c.b16 %v105, %v104
    %v115 = vpack.c.b16 %v107, %v106
    %124 = vmatprep.subr.bf16.mxu0 0
    %125 = vmatpush1.bf16.msra.mxu0 %v115
    %126 = vmatprep.subr.bf16.mxu0 0
    %127 = vmatpush1.bf16.msra.mxu0 %v114
    %128 = vmatprep.subr.bf16.mxu0 0
    %129 = vmatpush1.bf16.msra.mxu0 %v113
    %130 = vmatprep.subr.bf16.mxu0 0
    %131 = vmatpush1.bf16.msra.mxu0 %v112
    %132 = vmatprep.subr.bf16.mxu0 0
    %133 = vmatpush1.bf16.msra.mxu0 %v111
    %134 = vmatprep.subr.bf16.mxu0 0
    %135 = vmatpush1.bf16.msra.mxu0 %v110
    %136 = vmatprep.subr.bf16.mxu0 0
    %137 = vmatpush1.bf16.msra.mxu0 %v109
    %138 = vmatprep.subr.bf16.mxu0 0
    %139 = vmatpush1.bf16.msra.mxu0 %v108
    %140 = vmatprep.subr.bf16.mxu0 0
    %141 = vmatpush2.bf16.msra.mxu0 0
    %142 = vmatprep.subr.bf16.mxu0 0
    %143 = vmatpush2.bf16.msra.mxu0 0
    %144 = vmatprep.subr.bf16.mxu0 0
    %145 = vmatpush2.bf16.msra.mxu0 0
    %146 = vmatprep.subr.bf16.mxu0 0
    %147 = vmatpush2.bf16.msra.mxu0 0
    %148 = vmatprep.subr.bf16.mxu0 0
    %149 = vmatpush2.bf16.msra.mxu0 0
    %150 = vmatprep.subr.bf16.mxu0 0
    %151 = vmatpush2.bf16.msra.mxu0 0
    %152 = vmatprep.subr.bf16.mxu0 0
    %153 = vmatpush2.bf16.msra.mxu0 0
    %154 = vmatprep.subr.bf16.mxu0 0
    %155 = vmatpush2.bf16.msra.mxu0 0
    %156 = vmatprep.mubr.bf16.mxu0 0
    %157 = vmatmul.mubr.bf16.gmra.mxu0 %v46
    %v158 = vpop.f32.mrf.mxu0
    %v159 = vadd.f32 %v74, %v158
    %v160 = vpop.f32.mrf.mxu0
    %v161 = vpop.f32.mrf.mxu0
    %v162 = vadd.f32 %v74, %v161
    %v163 = vpop.f32.mrf.mxu0
    %164 = vdwg.mxu0
    %v165 = vadd.f32 %v159, %v67
    %v166 = vadd.f32 %v162, %v68
    %167 = vst [vmem:[#allocation7] sm:$0xff] %v165
    %168 = vst [vmem:[#allocation7 + $0x8] sm:$0xff] %v166
    // Predicated region
    $region22: #{tpu_custom_call.1} parent=1 // pred_check
      _
    $region23: #{tpu_custom_call.1} parent=1 // pred_check_branch
      %170 = sbr.rel (0) target = $region25
    $region24: #{tpu_custom_call.1} parent=1 // pred_region
      %s172 = ssub.s32 256, 256
      %173 = vsyncadd [#allocation4], %s172
      %s174 = sshll.u32 [#allocation7], 4
      %s175 = int_to_ptr.vmem [resolvable:$true] %s174
      %180 = dma.vmem_to_hbm [thread:$0]  %s175, 256, %s3, [#allocation4], 128, 128, 8
    $region25: #{tpu_custom_call.1} parent=1 // pred_fallthru
      _
    // Predicated region
    $region26: #{tpu_custom_call.1} parent=1 // pred_check
      _
    $region27: #{tpu_custom_call.1} parent=1 // pred_check_branch
      %182 = sbr.rel (0) target = $region29
    $region28: #{tpu_custom_call.1} parent=1 // pred_region
      %183 = dma.done [#allocation4], 256
    $region29: #{tpu_custom_call.1} parent=1 // pred_fallthru
      _
    %184 = vsyncpa [#allocation3], 1
    %185 = vsyncpa [#allocation6], 1
    %186 = vsyncpa [#allocation4], 1

</llo_original>
